<compile_context>
chip_gen: v6e
topology: v6e:2x2x1
jax: 0.10.0
libtpu: 0.0.40
codegen_flags: <defaults>
</compile_context>

<pallas_src>
import jax
import jax.numpy as jnp
from jax.experimental import pallas as pl
from jax.experimental.pallas import tpu as pltpu

GAMMA = 2.0  # module default; kernel uses an explicit square (gamma == 2)
NUM_CLASSES = 10
CLASS_WEIGHT = jnp.array(
    [1.0 / 600.0, 1.0 / 525.0, 1.0 / 500.0, 1.0 / 475.0, 1.0 / 450.0,
     1.0 / 300.0, 1.0 / 200.0, 1.0 / 150.0, 1.0 / 200.0, 1.0 / 150.0],
    dtype=jnp.float32,
)

# Tuned tile width (samples on the 128-lane axis).  ~7 MiB of VMEM buffers at 32768
# (double-buffered x + t + acc), well under the 16/32 MiB scoped limits on all chips.
_DEFAULT_TILE_N = 32768


def _round_up(x, m):
    return (x + m - 1) // m * m


def _num_tensorcores_per_chip():
    """2 TensorCores per chip only on v7x-class parts; v5e/v6e are single-core."""
    try:
        kind = jax.devices()[0].device_kind.lower()
    except Exception:
        return 1
    return 2 if ("v7" in kind or "tpu7" in kind or "7x" in kind) else 1


def _focal_loss_kernel(nvalid_ref, x_ref, t_ref, w_ref, o_ref, acc_ref):
    s_idx = pl.program_id(0)                 # parallel (core-split) axis
    i_idx = pl.program_id(1)                 # arbitrary (accumulation) axis
    tiles_per_split = pl.num_programs(1)

    @pl.when(i_idx == 0)
    def _():
        acc_ref[...] = jnp.zeros_like(acc_ref)

    x = x_ref[...].astype(jnp.float32)       # (C, TILE_N), samples lane-dense
    t = t_ref[...]                           # (1, TILE_N) int32 targets
    w = w_ref[...]                           # (C, 1) f32 class weights (resident block)
    c, tile_n = x.shape

    # numerically stable log-softmax over the class (sublane) axis
    m = jnp.max(x, axis=0, keepdims=True)
    z = x - m
    lse = jnp.log(jnp.sum(jnp.exp(z), axis=0, keepdims=True))
    logp = z - lse                           # (C, TILE_N)

    # fused one-hot gather: ce_i = -weight[t_i] * logp[t_i]
    # single select + single multiply (no int->f32 convert), one class reduce
    class_iota = jax.lax.broadcasted_iota(jnp.int32, x.shape, 0)
    picked = jnp.where(class_iota == t, w * logp, 0.0)
    ce = -jnp.sum(picked, axis=0, keepdims=True)          # (1, TILE_N)

    p = jnp.exp(-ce)
    one_minus_p = 1.0 - p
    focal = one_minus_p * one_minus_p * ce   # gamma == 2 -> explicit square, no pow

    n_valid = nvalid_ref[0]
    blk = s_idx * tiles_per_split + i_idx    # intended global block index
    needs_mask = (blk + 1) * tile_n > n_valid  # boundary block or ghost/padded block

    # fully in-bounds tiles: cheap unmasked accumulate (no iota/compare/select)
    @pl.when(jnp.logical_not(needs_mask))
    def _():
        acc_ref[...] += focal

    # ragged tail / ghost blocks: mask columns whose global index >= true N
    @pl.when(needs_mask)
    def _():
        col = blk * tile_n + jax.lax.broadcasted_iota(jnp.int32, focal.shape, 1)
        acc_ref[...] += jnp.where(col < n_valid, focal, 0.0)

    @pl.when(i_idx == tiles_per_split - 1)
    def _():
        total = jnp.sum(acc_ref[...])        # one cross-lane reduce per split
        lane = jax.lax.broadcasted_iota(jnp.int32, (1, 128), 1)
        o_ref[...] = jnp.where(lane == 0, total, 0.0)


def focal_loss_tpu(logits, target, *, tile_n=None, core_split=None):
    """logits: (N, C) float, target: (N,) int -> () float32 scalar focal loss."""
    n, c = logits.shape
    assert c == NUM_CLASSES

    if core_split is None:
        core_split = _num_tensorcores_per_chip()
    if tile_n is None:
        tile_n = min(_DEFAULT_TILE_N, _round_up(n, 128))
    assert tile_n % 128 == 0

    total_blocks = pl.cdiv(n, tile_n)
    tiles_per_split = _round_up(total_blocks, core_split) // core_split

    # Layout plumbing: (C, N) so samples are lane-dense.  No pad, no f32 cast:
    # the ragged tail is handled in-kernel and the upcast happens in VMEM.
    # TODO(synk): have the producer emit (C, N) directly (or use allow_input_fusion)
    # so this transpose does not cost an extra HBM round-trip.
    x_t = logits.T                                   # (C, N)
    t_t = target.astype(jnp.int32)[None, :]          # (1, N)
    w_col = CLASS_WEIGHT.reshape(c, 1)               # (C, 1)
    n_arr = jnp.array([n], dtype=jnp.int32)          # SMEM scalar: no recompile when N
                                                     # varies within the same grid bucket

    def _blk(s, i):
        # clamp ghost blocks introduced by rounding total_blocks up to core_split;
        # their contribution is zeroed by the in-kernel column mask.
        return jnp.minimum(s * tiles_per_split + i, total_blocks - 1)

    grid_spec = pltpu.PrefetchScalarGridSpec(
        num_scalar_prefetch=1,
        grid=(core_split, tiles_per_split),
        in_specs=[
            pl.BlockSpec((c, tile_n), lambda s, i, n_ref: (0, _blk(s, i))),
            pl.BlockSpec((1, tile_n), lambda s, i, n_ref: (0, _blk(s, i))),
            pl.BlockSpec((c, 1), lambda s, i, n_ref: (0, 0)),
        ],
        out_specs=pl.BlockSpec((1, 128), lambda s, i, n_ref: (0, s)),
        scratch_shapes=[pltpu.VMEM((1, tile_n), jnp.float32)],
    )

    partial_sums = pl.pallas_call(
        _focal_loss_kernel,
        out_shape=jax.ShapeDtypeStruct((1, core_split * 128), jnp.float32),
        grid_spec=grid_spec,
        compiler_params=pltpu.CompilerParams(
            # On v7x, switch to pltpu.CORE_PARALLEL if profiling shows both splits
            # landing on one TensorCore; "parallel" is a no-op cost on v5e/v6e.
            dimension_semantics=("parallel", "arbitrary"),
            vmem_limit_bytes=32 * 1024 * 1024,   # raises v5e's 16 MiB default for big tiles
        ),
        cost_estimate=pl.CostEstimate(
            flops=60 * n, transcendentals=12 * n, bytes_accessed=(c * 4 + 4) * n),
    )(n_arr, x_t, t_t, w_col)

    # non-lane-0 entries are exactly 0, so summing the slab adds the per-split partials
    return jnp.sum(partial_sums) / jnp.float32(n)


def _focal_loss_ref(logits, target):
    """Pure-JAX reference mirroring the PyTorch semantics."""
    logp = jax.nn.log_softmax(logits.astype(jnp.float32), axis=-1)
    nll = -jnp.take_along_axis(logp, target[:, None].astype(jnp.int32), axis=-1)[:, 0]
    ce = CLASS_WEIGHT[target] * nll
    p = jnp.exp(-ce)
    return jnp.mean((1.0 - p) ** GAMMA * ce)


if __name__ == "__main__":
    key = jax.random.PRNGKey(0)
    k1, k2, k3, k4 = jax.random.split(key, 4)
    C = NUM_CLASSES

    # small case (matches module: N samples, C=10 classes)
    N = 8
    logits = jax.random.normal(k1, (N, C), dtype=jnp.float32) * 2.0
    target = jax.random.randint(k2, (N,), 0, C, dtype=jnp.int32)
    out = focal_loss_tpu(logits, target)
    jax.block_until_ready(out)
    ref = _focal_loss_ref(logits, target)
    assert jnp.allclose(out, ref, rtol=1e-4, atol=1e-9), (out, ref)

    # ragged case: default big tile, explicit multi-tile accumulation,
    # and a forced core_split=2 path with a ghost block (exercises the clamp + mask).
    N2 = 1000
    logits2 = jax.random.normal(k3, (N2, C), dtype=jnp.float32) * 2.0
    target2 = jax.random.randint(k4, (N2,), 0, C, dtype=jnp.int32)
    ref2 = _focal_loss_ref(logits2, target2)

    out2 = focal_loss_tpu(logits2, target2)
    out3 = focal_loss_tpu(logits2, target2, tile_n=256)
    out4 = focal_loss_tpu(logits2, target2, tile_n=384, core_split=2)
    jax.block_until_ready((out2, out3, out4))
    for o in (out2, out3, out4):
        assert jnp.allclose(o, ref2, rtol=1e-4, atol=1e-9), (o, ref2)

    print("KERNEL_OK")
</pallas_src>

<mosaic_0001>
module attributes {stable_mosaic.version = 11 : i64} {
  func.func @_focal_loss_kernel(%arg0: i32, %arg1: i32, %arg2: memref<1xi32, #tpu.memory_space<smem>>, %arg3: memref<10x128xf32, #tpu.memory_space<vmem>>, %arg4: memref<1x128xi32, #tpu.memory_space<vmem>>, %arg5: memref<10x1xf32, #tpu.memory_space<vmem>>, %arg6: memref<1x128xf32, #tpu.memory_space<vmem>>, %arg7: memref<1x128xf32, #tpu.memory_space<vmem>>) attributes {dimension_semantics = [#tpu.dimension_semantics<parallel>, #tpu.dimension_semantics<arbitrary>], iteration_bounds = array<i64: 1, 1>, scalar_prefetch = 1 : i64, scratch_operands = 1 : i64, tpu.core_type = #tpu.core_type<tc>, window_params = [{transform_indices = @transform_0, window_bounds = array<i64: 10, 128>}, {transform_indices = @transform_1, window_bounds = array<i64: 1, 128>}, {pipeline_mode = #tpu.pipeline_mode<synchronous>, transform_indices = @transform_2, window_bounds = array<i64: 10, 1>}, {transform_indices = @transform_3, window_bounds = array<i64: 1, 128>}]} {
    %c0_i32 = arith.constant 0 : i32
    %0 = arith.cmpi eq, %arg1, %c0_i32 : i32
    %1 = arith.extui %0 : i1 to i32
    %c0_i32_0 = arith.constant 0 : i32
    %2 = arith.cmpi ne, %1, %c0_i32_0 : i32
    scf.if %2 {
      %cst_18 = arith.constant 0.000000e+00 : f32
      %48 = vector.broadcast %cst_18 : f32 to vector<1x128xf32>
      %c0_19 = arith.constant 0 : index
      %c0_20 = arith.constant 0 : index
      %49 = vector.load %arg7[%c0_19, %c0_20] : memref<1x128xf32, #tpu.memory_space<vmem>>, vector<1x128xf32>
      tpu.vector_store %arg7[%c0_19, %c0_20], %48 {strides = array<i32>} : memref<1x128xf32, #tpu.memory_space<vmem>>, vector<1x128xf32>,
    } else {
    }
    %c0 = arith.constant 0 : index
    %c0_1 = arith.constant 0 : index
    %3 = vector.load %arg3[%c0, %c0_1] : memref<10x128xf32, #tpu.memory_space<vmem>>, vector<10x128xf32>
    %c0_2 = arith.constant 0 : index
    %c0_3 = arith.constant 0 : index
    %4 = vector.load %arg4[%c0_2, %c0_3] : memref<1x128xi32, #tpu.memory_space<vmem>>, vector<1x128xi32>
    %c0_4 = arith.constant 0 : index
    %c0_5 = arith.constant 0 : index
    %5 = vector.load %arg5[%c0_4, %c0_5] : memref<10x1xf32, #tpu.memory_space<vmem>>, vector<10x1xf32>
    %cst = arith.constant dense<0xFF800000> : vector<128xf32>
    %6 = vector.multi_reduction <maximumf>, %3, %cst [0] : vector<10x128xf32> to vector<128xf32>
    %7 = vector.shape_cast %6 : vector<128xf32> to vector<1x128xf32>
    %8 = vector.broadcast %7 : vector<1x128xf32> to vector<10x128xf32>
    %9 = arith.subf %3, %8 : vector<10x128xf32>
    %10 = math.exp %9 : vector<10x128xf32>
    %cst_6 = arith.constant dense<0.000000e+00> : vector<128xf32>
    %11 = vector.multi_reduction <add>, %10, %cst_6 [0] : vector<10x128xf32> to vector<128xf32>
    %12 = vector.shape_cast %11 : vector<128xf32> to vector<1x128xf32>
    %13 = math.log %12 : vector<1x128xf32>
    %14 = vector.broadcast %13 : vector<1x128xf32> to vector<10x128xf32>
    %15 = arith.subf %9, %14 : vector<10x128xf32>
    %16 = tpu.iota {dimensions = array<i32: 0>} : vector<10x128xi32>
    %17 = vector.broadcast %4 : vector<1x128xi32> to vector<10x128xi32>
    %18 = arith.cmpi eq, %16, %17 : vector<10x128xi32>
    %19 = vector.broadcast %5 : vector<10x1xf32> to vector<10x128xf32>
    %20 = arith.mulf %19, %15 : vector<10x128xf32>
    %cst_7 = arith.constant 0.000000e+00 : f32
    %21 = vector.broadcast %cst_7 : f32 to vector<10x128xf32>
    %22 = arith.select %18, %20, %21 : vector<10x128xi1>, vector<10x128xf32>
    %cst_8 = arith.constant dense<0.000000e+00> : vector<128xf32>
    %23 = vector.multi_reduction <add>, %22, %cst_8 [0] : vector<10x128xf32> to vector<128xf32>
    %24 = vector.shape_cast %23 : vector<128xf32> to vector<1x128xf32>
    %cst_9 = arith.constant 0.000000e+00 : f32
    %25 = vector.broadcast %cst_9 : f32 to vector<1x128xf32>
    %26 = arith.subf %25, %24 : vector<1x128xf32>
    %cst_10 = arith.constant 0.000000e+00 : f32
    %27 = vector.broadcast %cst_10 : f32 to vector<1x128xf32>
    %28 = arith.subf %27, %26 : vector<1x128xf32>
    %29 = math.exp %28 : vector<1x128xf32>
    %cst_11 = arith.constant 1.000000e+00 : f32
    %30 = vector.broadcast %cst_11 : f32 to vector<1x128xf32>
    %31 = arith.subf %30, %29 : vector<1x128xf32>
    %32 = arith.mulf %31, %31 : vector<1x128xf32>
    %33 = arith.mulf %32, %26 : vector<1x128xf32>
    %c0_12 = arith.constant 0 : index
    %34 = memref.load %arg2[%c0_12] : memref<1xi32, #tpu.memory_space<smem>>
    %c1_i32 = arith.constant 1 : i32
    %35 = arith.muli %arg0, %c1_i32 : i32
    %36 = arith.addi %35, %arg1 : i32
    %c1_i32_13 = arith.constant 1 : i32
    %37 = arith.addi %36, %c1_i32_13 : i32
    %c128_i32 = arith.constant 128 : i32
    %38 = arith.muli %37, %c128_i32 : i32
    %39 = arith.cmpi sgt, %38, %34 : i32
    %true = arith.constant true
    %40 = arith.xori %39, %true : i1
    %41 = arith.extui %40 : i1 to i32
    %c0_i32_14 = arith.constant 0 : i32
    %42 = arith.cmpi ne, %41, %c0_i32_14 : i32
    scf.if %42 {
      %c0_18 = arith.constant 0 : index
      %c0_19 = arith.constant 0 : index
      %48 = vector.load %arg7[%c0_18, %c0_19] : memref<1x128xf32, #tpu.memory_space<vmem>>, vector<1x128xf32>
      %49 = arith.addf %48, %33 : vector<1x128xf32>
      %c0_20 = arith.constant 0 : index
      %c0_21 = arith.constant 0 : index
      %50 = vector.load %arg7[%c0_20, %c0_21] : memref<1x128xf32, #tpu.memory_space<vmem>>, vector<1x128xf32>
      tpu.vector_store %arg7[%c0_20, %c0_21], %49 {strides = array<i32>} : memref<1x128xf32, #tpu.memory_space<vmem>>, vector<1x128xf32>,
    } else {
    }
    %43 = arith.extui %39 : i1 to i32
    %c0_i32_15 = arith.constant 0 : i32
    %44 = arith.cmpi ne, %43, %c0_i32_15 : i32
    scf.if %44 {
      %c128_i32_18 = arith.constant 128 : i32
      %48 = arith.muli %36, %c128_i32_18 : i32
      %49 = tpu.iota {dimensions = array<i32: 1>} : vector<1x128xi32>
      %50 = vector.broadcast %48 : i32 to vector<1x128xi32>
      %51 = arith.addi %50, %49 : vector<1x128xi32>
      %c0_19 = arith.constant 0 : index
      %c0_20 = arith.constant 0 : index
      %52 = vector.load %arg7[%c0_19, %c0_20] : memref<1x128xf32, #tpu.memory_space<vmem>>, vector<1x128xf32>
      %53 = vector.broadcast %34 : i32 to vector<1x128xi32>
      %54 = arith.cmpi slt, %51, %53 : vector<1x128xi32>
      %cst_21 = arith.constant 0.000000e+00 : f32
      %55 = vector.broadcast %cst_21 : f32 to vector<1x128xf32>
      %56 = arith.select %54, %33, %55 : vector<1x128xi1>, vector<1x128xf32>
      %57 = arith.addf %52, %56 : vector<1x128xf32>
      %c0_22 = arith.constant 0 : index
      %c0_23 = arith.constant 0 : index
      %58 = vector.load %arg7[%c0_22, %c0_23] : memref<1x128xf32, #tpu.memory_space<vmem>>, vector<1x128xf32>
      tpu.vector_store %arg7[%c0_22, %c0_23], %57 {strides = array<i32>} : memref<1x128xf32, #tpu.memory_space<vmem>>, vector<1x128xf32>,
    } else {
    }
    %c0_i32_16 = arith.constant 0 : i32
    %45 = arith.cmpi eq, %arg1, %c0_i32_16 : i32
    %46 = arith.extui %45 : i1 to i32
    %c0_i32_17 = arith.constant 0 : i32
    %47 = arith.cmpi ne, %46, %c0_i32_17 : i32
    scf.if %47 {
      %c0_18 = arith.constant 0 : index
      %c0_19 = arith.constant 0 : index
      %48 = vector.load %arg7[%c0_18, %c0_19] : memref<1x128xf32, #tpu.memory_space<vmem>>, vector<1x128xf32>
      %49 = vector.shape_cast %48 : vector<1x128xf32> to vector<1x1x128xf32>
      %cst_20 = arith.constant dense<0.000000e+00> : vector<1xf32>
      %50 = vector.multi_reduction <add>, %49, %cst_20 [1, 2] : vector<1x1x128xf32> to vector<1xf32>
      %51 = vector.shape_cast %50 : vector<1xf32> to vector<1x1x1xf32>
      %52 = vector.extract %51[0, 0, 0] : f32 from vector<1x1x1xf32>
      %53 = tpu.iota {dimensions = array<i32: 1>} : vector<1x128xi32>
      %c0_i32_21 = arith.constant 0 : i32
      %54 = vector.broadcast %c0_i32_21 : i32 to vector<1x128xi32>
      %55 = arith.cmpi eq, %53, %54 : vector<1x128xi32>
      %cst_22 = arith.constant 0.000000e+00 : f32
      %56 = vector.broadcast %52 : f32 to vector<1x128xf32>
      %57 = vector.broadcast %cst_22 : f32 to vector<1x128xf32>
      %58 = arith.select %55, %56, %57 : vector<1x128xi1>, vector<1x128xf32>
      %c0_23 = arith.constant 0 : index
      %c0_24 = arith.constant 0 : index
      %59 = vector.load %arg6[%c0_23, %c0_24] : memref<1x128xf32, #tpu.memory_space<vmem>>, vector<1x128xf32>
      tpu.vector_store %arg6[%c0_23, %c0_24], %58 {strides = array<i32>} : memref<1x128xf32, #tpu.memory_space<vmem>>, vector<1x128xf32>,
    } else {
    }
    return
  }
  func.func @transform_0(%arg0: i32, %arg1: i32, %arg2: memref<1xi32, #tpu.memory_space<smem>>) -> (i32, i32) {
    %c1_i32 = arith.constant 1 : i32
    %0 = arith.muli %arg0, %c1_i32 : i32
    %1 = arith.addi %0, %arg1 : i32
    %c0_i32 = arith.constant 0 : i32
    %2 = arith.minsi %1, %c0_i32 : i32
    %c0_i32_0 = arith.constant 0 : i32
    %c0_i32_1 = arith.constant 0 : i32
    return %c0_i32_0, %2 : i32, i32
  }
  func.func @transform_1(%arg0: i32, %arg1: i32, %arg2: memref<1xi32, #tpu.memory_space<smem>>) -> (i32, i32) {
    %c1_i32 = arith.constant 1 : i32
    %0 = arith.muli %arg0, %c1_i32 : i32
    %1 = arith.addi %0, %arg1 : i32
    %c0_i32 = arith.constant 0 : i32
    %2 = arith.minsi %1, %c0_i32 : i32
    %c0_i32_0 = arith.constant 0 : i32
    %c0_i32_1 = arith.constant 0 : i32
    return %c0_i32_0, %2 : i32, i32
  }
  func.func @transform_2(%arg0: i32, %arg1: i32, %arg2: memref<1xi32, #tpu.memory_space<smem>>) -> (i32, i32) {
    %c0_i32 = arith.constant 0 : i32
    %c0_i32_0 = arith.constant 0 : i32
    %c0_i32_1 = arith.constant 0 : i32
    return %c0_i32, %c0_i32_0 : i32, i32
  }
  func.func @transform_3(%arg0: i32, %arg1: i32, %arg2: memref<1xi32, #tpu.memory_space<smem>>) -> (i32, i32) {
    %c0_i32 = arith.constant 0 : i32
    %c0_i32_0 = arith.constant 0 : i32
    return %c0_i32, %arg0 : i32, i32
  }
}

</mosaic_0001>

<llo_original>
// kernel: tpu_custom_call.1
$region0: #{tpu_custom_call.1}
  #allocation0 [shape = 'u32[]', space=smem, size = 0x4, offset = 0x4, fixed_abs, tag = 'smem constant byte address 0x4 - core index']
  #allocation1 [shape = 'u32[144,128]{1,0:T(1,128)}', space=vmem, size = 0x12000, scoped, tag = 'internal scratch']
  #allocation2 [shape = 'f32[1,128]{1,0:T(1,128)}', space=vmem, size = 0x200, scoped, tag = 'scratch operand']
  #allocation3 [shape = 's32[1]{0}', space=sflag, size = 0x4, scoped, tag = 'scoped memory for tpu_custom_call.1']
  #allocation4 [shape = 's32[1]{0:T(128)S(6)}', space=smem, size = 0x200, scoped, tag = 'prefetched SMEM operand 0']
  %s0 = inlined_call_operand.<no memory space> [shape: s32[1], index: 0, kind: input, shape index: {}]
  %s1 = inlined_call_operand.vmem [shape: f32[10,8], index: 1, kind: input, shape index: {}]
  %s2 = inlined_call_operand.vmem [shape: s32[1,8], index: 2, kind: input, shape index: {}]
  %s3 = inlined_call_operand.vmem [shape: f32[10,1], index: 3, kind: input, shape index: {}]
  %s4 = inlined_call_operand.hbm [shape: f32[1,128], index: 4, kind: output, shape index: {}]
  %s5 = sld [smem:[#allocation0]]
  $region38: #{tpu_custom_call.1} parent=0
    _
  %s7 = ssub.s32 1, %s5
  %s8 = scalar_select 0, %s7, %s5
  %9 = sst [smem:[#allocation4]] %s0
  $region1: #{tpu_custom_call.1} parent=0
    #allocation5 [shape = 'u8[512]{0}', space=vmem, size = 0x400, scoped, tag = 'output window, operand 0, single buffered']
    #allocation6 [shape = 's32[1]{0}', space=sflag, size = 0x4, scoped, tag = 'scoped memory for tpu_custom_call.1']
    %10 = vsyncpa [#allocation6], 0
    // Predicated region
    $region2: #{tpu_custom_call.1} parent=1 // pred_check
      _
    $region3: #{tpu_custom_call.1} parent=1 // pred_check_branch
      %12 = sbr.rel (0) target = $region5
    $region4: #{tpu_custom_call.1} parent=1 // pred_region
      %s13 = sadd.s32 0, 0
      %p14 = scmp.lt.s32.totalorder %s13, 0
      %s15 = scalar_select %p14, %s13, 0
      %p16 = scmp.lt.s32.totalorder %s15, 0
      %s17 = scalar_select %p16, %s15, 0
      %s18 = smul.addr %s17, 8
      %s19 = scalar_lea.vmem %s1, %s18
      %s20 = sadd.s32 0, 0
      %p21 = scmp.lt.s32.totalorder %s20, 0
      %s22 = scalar_select %p21, %s20, 0
    $region5: #{tpu_custom_call.1} parent=1 // pred_fallthru
      _
    // Predicated region
    $region6: #{tpu_custom_call.1} parent=1 // pred_check
      _
    $region7: #{tpu_custom_call.1} parent=1 // pred_check_branch
      %24 = sbr.rel (0) target = $region9
    $region8: #{tpu_custom_call.1} parent=1 // pred_region
      %s25 = sadd.s32 0, 0
      %p26 = scmp.lt.s32.totalorder %s25, 0
      %s27 = scalar_select %p26, %s25, 0
      %p28 = scmp.lt.s32.totalorder %s27, 0
      %s29 = scalar_select %p28, %s27, 0
      %s30 = scalar_lea.vmem %s2, %s29
      %s31 = sadd.s32 0, 0
      %p32 = scmp.lt.s32.totalorder %s31, 0
      %s33 = scalar_select %p32, %s31, 0
    $region9: #{tpu_custom_call.1} parent=1 // pred_fallthru
      _
    // Predicated region
    $region10: #{tpu_custom_call.1} parent=1 // pred_check
      _
    $region11: #{tpu_custom_call.1} parent=1 // pred_check_branch
      %35 = sbr.rel (0) target = $region13
    $region12: #{tpu_custom_call.1} parent=1 // pred_region
      _
    $region13: #{tpu_custom_call.1} parent=1 // pred_fallthru
      _
    %s36 = sadd.s32 0, 0
    %p37 = scmp.lt.s32.totalorder %s36, 0
    %s38 = scalar_select %p37, %s36, 0
    %p39 = scmp.lt.s32.totalorder %s38, 0
    %s40 = scalar_select %p39, %s38, 0
    %s41 = smul.addr %s40, 8
    %s42 = scalar_lea.vmem %s1, %s41
    %s43 = sadd.s32 0, 0
    %p44 = scmp.lt.s32.totalorder %s43, 0
    %s45 = scalar_select %p44, %s43, 0
    %p46 = scmp.lt.s32.totalorder %s45, 0
    %s47 = scalar_select %p46, %s45, 0
    %s48 = scalar_lea.vmem %s2, %s47
    %s49 = sadd.s32 0, 0
    %p50 = scmp.lt.s32.totalorder %s49, 0
    %s51 = scalar_select %p50, %s49, 0
    %p52 = scmp.lt.s32.totalorder %s51, 0
    %s53 = scalar_select %p52, %s51, 0
    %s54 = smul.addr %s53, 8
    %s55 = scalar_lea.vmem %s1, %s54
    %s56 = sadd.s32 0, 0
    %p57 = scmp.lt.s32.totalorder %s56, 0
    %s58 = scalar_select %p57, %s56, 0
    %s59 = sadd.s32 0, 0
    %p60 = scmp.lt.s32.totalorder %s59, 0
    %s61 = scalar_select %p60, %s59, 0
    %p62 = scmp.lt.s32.totalorder %s61, 0
    %s63 = scalar_select %p62, %s61, 0
    %s64 = scalar_lea.vmem %s2, %s63
    %s65 = sadd.s32 0, 0
    %p66 = scmp.lt.s32.totalorder %s65, 0
    %s67 = scalar_select %p66, %s65, 0
    %p68 = scmp.eq.s32.totalorder 0, 0
    // Predicated region
    $region14: #{tpu_custom_call.1} parent=1 // pred_check
      %p69 = pneg %p68
    $region15: #{tpu_custom_call.1} parent=1 // pred_check_branch
      %71 = sbr.rel (%p69) target = $region17
    $region16: #{tpu_custom_call.1} parent=1 // pred_region
      %72 = vst [vmem:[#allocation2] sm:$0x1] 0.0
    $region17: #{tpu_custom_call.1} parent=1 // pred_fallthru
      _
    %v73 = vld [vmem:[%s55] sm:$0xff]
    %v74 = vld [vmem:[%s55 + $0x8] sm:$0x3]
    %v75 = vld [vmem:[%s64] sm:$0x1]
    %v76 = vld [vmem:[%s3] sm:$0xff]
    %v77 = vld [vmem:[%s3 + $0x8] sm:$0x3]
    %vm78 = vcmask 1041408
    %v79 = vsel %vm78, %v74, -inf
    %v80 = vmax.f32 %v73, %v79
    %v81 = vrot.slane %v80, 4
    %v82 = vmax.f32 %v80, %v81
    %v83 = vrot.slane %v82, 2
    %v84 = vmax.f32 %v82, %v83
    %v85 = vrot.slane %v84, 1
    %v86 = vmax.f32 %v84, %v85
    %v87 = vsub.f32 %v73, %v86
    %v88 = vsub.f32 %v74, %v86
    %v89 = vmul.f32 %v87, 1.442695
    %v90 = vpow.pop %v89
    %v91 = vmul.f32 %v88, 1.442695
    %v92 = vpow.pop %v91
    %v93 = vsel %vm78, %v92, 0.0
    %v94 = vadd.f32 %v90, %v93
    %v95 = vrot.slane %v94, 4
    %v96 = vadd.f32 %v94, %v95
    %v97 = vrot.slane %v96, 2
    %v98 = vadd.f32 %v96, %v97
    %v99 = vrot.slane %v98, 1
    %v100 = vadd.f32 %v98, %v99
    %v101 = vlog2.pop %v100
    %v102 = vmul.f32 %v101, 0.6931472
    %v103 = vsub.f32 %v87, %v102
    %v104 = vsub.f32 %v88, %v102
    %v105 = vlaneseq
    %v106 = vshrl.u32 %v105, 7
    %v107 = vadd.s32 %v106, 8
    %v108 = vlaneseq
    %v109 = vshrl.u32 %v108, 7
    %v110 = vsub.s32 0, %v109
    %v111 = vrot.slane %v75, %v110
    %vm112 = vcmp.eq.s32.totalorder %v106, %v111
    %vm113 = vcmp.eq.s32.totalorder %v107, %v111
    %115 = vset.pattern.permute.xlu0 0
    %116 = vperm.xlu0 %115, %v76
    %v117 = vpop.permute.xlu0 %116
    %120 = vset.pattern.permute.xlu0 0
    %121 = vperm.xlu0 %120, %v77
    %v122 = vpop.permute.xlu0 %121
    %v124 = vmul.f32 %v117, %v103
    %v125 = vmul.f32 %v122, %v104
    %v126 = vsel %vm112, %v124, 0.0
    %v127 = vsel %vm113, %v125, 0.0
    %v128 = vsel %vm78, %v127, 0.0
    %v129 = vadd.f32 %v126, %v128
    %v130 = vrot.slane %v129, 4
    %v131 = vadd.f32 %v129, %v130
    %v132 = vrot.slane %v131, 2
    %v133 = vadd.f32 %v131, %v132
    %v134 = vrot.slane %v133, 1
    %v135 = vadd.f32 %v133, %v134
    %v136 = vsub.f32 0.0, %v135
    %v137 = vsub.f32 0.0, %v136
    %v138 = vmul.f32 %v137, 1.442695
    %v139 = vpow.pop %v138
    %v140 = vsub.f32 1.0, %v139
    %v141 = vmul.f32 %v140, %v140
    %v142 = vmul.f32 %v141, %v136
    %s143 = sld [smem:[#allocation4]]
    %s144 = sadd.s32 0, 0
    %s145 = sadd.s32 %s144, 1
    %s146 = smul.u32 %s145, 128
    %p147 = scmp.gt.s32.totalorder %s146, %s143
    %p148 = scmp.le.s32.totalorder %s146, %s143
    // Predicated region
    $region18: #{tpu_custom_call.1} parent=1 // pred_check
      %p149 = pneg %p148
    $region19: #{tpu_custom_call.1} parent=1 // pred_check_branch
      %151 = sbr.rel (%p149) target = $region21
    $region20: #{tpu_custom_call.1} parent=1 // pred_region
      %v152 = vld [vmem:[#allocation2] sm:$0x1]
      %v153 = vadd.f32 %v152, %v142
      %154 = vst [vmem:[#allocation2] sm:$0x1] %v153
    $region21: #{tpu_custom_call.1} parent=1 // pred_fallthru
      _
    // Predicated region
    $region22: #{tpu_custom_call.1} parent=1 // pred_check
      %p155 = pneg %p147
    $region23: #{tpu_custom_call.1} parent=1 // pred_check_branch
      %157 = sbr.rel (%p155) target = $region25
    $region24: #{tpu_custom_call.1} parent=1 // pred_region
      %s158 = smul.u32 %s144, 128
      %v159 = vlaneseq
      %v160 = vand.u32 %v159, 127
      %v161 = vstv %s158
      %v162 = vadd.s32 %v161, %v160
      %v163 = vld [vmem:[#allocation2] sm:$0x1]
      %v164 = vstv %s143
      %vm165 = vcmp.lt.s32.totalorder %v162, %v164
      %v166 = vsel %vm165, %v142, 0.0
      %v167 = vadd.f32 %v163, %v166
      %168 = vst [vmem:[#allocation2] sm:$0x1] %v167
    $region25: #{tpu_custom_call.1} parent=1 // pred_fallthru
      _
    // Predicated region
    $region26: #{tpu_custom_call.1} parent=1 // pred_check
      %p169 = pneg %p68
    $region27: #{tpu_custom_call.1} parent=1 // pred_check_branch
      %171 = sbr.rel (%p169) target = $region29
    $region28: #{tpu_custom_call.1} parent=1 // pred_region
      %v172 = vld [vmem:[#allocation2] sm:$0x1]
      %vm173 = vcmask 1040384
      %v174 = vsel %vm173, %v172, 0.0
      %175 = vadd.xlane.f32.xlu0 %v174
      %v176 = vpop.xlane.xlu0 %175
      %v177 = vrot.slane %v176, 4
      %v178 = vadd.f32 %v176, %v177
      %v179 = vrot.slane %v178, 2
      %v180 = vadd.f32 %v178, %v179
      %v181 = vrot.slane %v180, 1
      %v182 = vadd.f32 %v180, %v181
      %s183 = vtos %v182
      %v184 = vlaneseq
      %v185 = vand.u32 %v184, 127
      %vm186 = vcmp.eq.s32.totalorder %v185, 0
      %v187 = vstv %s183
      %v188 = vsel %vm186, %v187, 0.0
      %189 = vst [vmem:[#allocation5] sm:$0x1] %v188
    $region29: #{tpu_custom_call.1} parent=1 // pred_fallthru
      _
    // Predicated region
    $region30: #{tpu_custom_call.1} parent=1 // pred_check
      _
    $region31: #{tpu_custom_call.1} parent=1 // pred_check_branch
      %191 = sbr.rel (0) target = $region33
    $region32: #{tpu_custom_call.1} parent=1 // pred_region
      %s193 = ssub.s32 16, 16
      %194 = vsyncadd [#allocation6], %s193
      %s196 = sshll.u32 [#allocation5], 4
      %s197 = int_to_ptr.vmem [resolvable:$true] %s196
      %199 = dma.vmem_to_hbm [thread:$0]  %s197, 16, %s4, [#allocation6]
    $region33: #{tpu_custom_call.1} parent=1 // pred_fallthru
      _
    // Predicated region
    $region34: #{tpu_custom_call.1} parent=1 // pred_check
      _
    $region35: #{tpu_custom_call.1} parent=1 // pred_check_branch
      %201 = sbr.rel (0) target = $region37
    $region36: #{tpu_custom_call.1} parent=1 // pred_region
      %202 = dma.done [#allocation6], 16
    $region37: #{tpu_custom_call.1} parent=1 // pred_fallthru
      _
    %203 = vsyncpa [#allocation6], 1

</llo_original>
